<compile_context>
chip_gen: v7x
topology: tpu7x:2x2x1
jax: 0.10.0
libtpu: 0.0.40
codegen_flags: <defaults>
</compile_context>

<pallas_src>
import functools

import jax
import jax.numpy as jnp
from jax import lax
from jax.experimental import pallas as pl
from jax.experimental.pallas import tpu as pltpu


def plain_layer_kernel(x_ref, w_ref, scale_ref, shift_ref, mask_ref, o_ref, *,
                       img_w, k_pad):
    """One batch-block per grid step.

    x_ref     : (Cin, B*HW)   VMEM, input dtype  channel-major activations,
                                                 each image's HW contiguous on lanes
    w_ref     : (Cout, K_pad) VMEM bf16          column order (kh*3+kw)*Cin + ci,
                                                 zero-padded to K_pad columns
    scale_ref : (Cin, 1)      VMEM f32           gamma / sqrt(var + eps)
    shift_ref : (Cin, 1)      VMEM f32           beta - mean * scale
    mask_ref  : (9, B*HW)     VMEM bf16          0/1 validity mask per conv tap,
                                                 tiled over the B images
    o_ref     : (Cout, B*HW)  VMEM f32           lane-dense output
    """
    cin, bhw = x_ref.shape

    # fused eval-mode BatchNorm (folded scale/shift) + ReLU in f32 on the VPU,
    # then a single cast to bf16 so the rolls (XLU), mask multiplies (VPU) and
    # MXU operands are half-width.
    act = jnp.maximum(
        x_ref[...].astype(jnp.float32) * scale_ref[...] + shift_ref[...],
        0.0).astype(jnp.bfloat16)

    # im2col assembled in-register: each tap is a lane roll of the flattened
    # spatial axis; the padding=1 border (and any cross-image / wrap-around
    # contamination of the wide roll) is zeroed by the precomputed 0/1 mask.
    taps = []
    for t, (kh, kw) in enumerate(
            [(kh, kw) for kh in range(3) for kw in range(3)]):
        d = (kh - 1) * img_w + (kw - 1)            # flattened spatial shift
        sh = act if d == 0 else jnp.roll(act, -d, axis=1)
        taps.append(sh * mask_ref[t:t + 1, :])
    n_pad = k_pad - 9 * cin                        # keep K a multiple of 8
    if n_pad:
        taps.append(jnp.zeros((n_pad, bhw), jnp.bfloat16))
    pat = jnp.concatenate(taps, axis=0)            # (K_pad, B*HW) bf16

    # single MXU matmul for the whole batch-block (bf16 operands, f32 acc)
    o_ref[...] = jnp.dot(w_ref[...], pat,
                         preferred_element_type=jnp.float32).astype(o_ref.dtype)


def _pick_block_batch(n):
    """Largest divisor of n that still leaves >=4 (else >=2) grid steps."""
    for min_steps in (4, 2):
        for b in range(n, 0, -1):
            if n % b == 0 and n // b >= min_steps:
                return b
    return n


@functools.partial(jax.jit, static_argnames=("eps", "block_batch"))
def plain_layer(x_nchw, w_oihw, gamma, beta, running_mean, running_var,
                eps=1e-5, block_batch=None):
    """PlainLayer forward (eval mode).  Input/output are NCHW, like PyTorch."""
    N, Cin, H, W = x_nchw.shape
    Cout = w_oihw.shape[0]
    HW = H * W
    K = 9 * Cin
    K_pad = ((K + 7) // 8) * 8          # sublane-aligned contraction dim

    if block_batch is None:
        # keep >=2 (ideally >=4) grid steps so v7x's 2 TensorCores both work,
        # while batching as many images as possible into one MXU matmul.
        block_batch = _pick_block_batch(N)
    assert N % block_batch == 0
    grid = N // block_batch
    BHW = block_batch * HW

    # channel-major, lane-dense activation slab (Cin, N*HW): each image's HW
    # span contiguous on lanes.  Cheap HBM transpose in the wrapper; buys one
    # big matmul + unmasked lane-dense stores in the kernel.  Input dtype is
    # passed through (bf16 callers keep half HBM traffic).
    x = x_nchw.reshape(N, Cin, HW).transpose(1, 0, 2).reshape(Cin, N * HW)

    # (Cout, Cin, 3, 3) -> (Cout, 9*Cin), column order (kh*3+kw)*Cin + ci,
    # zero-padded to K_pad columns; bf16 for the MXU.  Tiny, done once.
    w = jnp.transpose(w_oihw.astype(jnp.float32), (0, 2, 3, 1)).reshape(Cout, K)
    w = jnp.pad(w, ((0, 0), (0, K_pad - K))).astype(jnp.bfloat16)

    # fold eval-mode BN into per-channel scale/shift (broadcast over lanes)
    inv_std = lax.rsqrt(running_var.astype(jnp.float32) + eps)
    scale = (gamma.astype(jnp.float32) * inv_std).reshape(Cin, 1)
    shift = (beta.astype(jnp.float32)
             - running_mean.astype(jnp.float32) * gamma.astype(jnp.float32)
             * inv_std).reshape(Cin, 1)

    # constant 0/1 validity masks for the 9 taps of a 3x3 / padding=1 conv,
    # tiled across the block_batch images that share a grid step (0/1 -> exact
    # in bf16).
    hh = jnp.arange(H)
    ww = jnp.arange(W)
    rows = []
    for kh in range(3):
        for kw in range(3):
            mh = (hh + kh - 1 >= 0) & (hh + kh - 1 < H)
            mw = (ww + kw - 1 >= 0) & (ww + kw - 1 < W)
            rows.append((mh[:, None] & mw[None, :]).reshape(HW))
    tap_mask = jnp.stack(rows, axis=0).astype(jnp.bfloat16)          # (9, HW)
    tap_mask = jnp.tile(tap_mask, (1, block_batch))                  # (9, B*HW)

    # explicit VMEM budget: double-buffered in/out blocks + tiled mask +
    # weight/scale/shift + bf16 pattern temporary.  Tiny here; re-budget
    # against v7x's 64 MiB physical / 32 MiB default scoped before scaling
    # H/W/C (shrink via bf16 first, block_batch only as a last resort).
    x_bytes = jnp.dtype(x_nchw.dtype).itemsize
    step_bytes = (2 * Cin * BHW * x_bytes            # input block
                  + 2 * Cout * BHW * 4               # output block
                  + 2 * 9 * BHW * 2                  # tap mask
                  + 2 * (Cout * K_pad * 2 + 2 * Cin * 4)
                  + K_pad * BHW * 2)                 # bf16 pattern temporary
    vmem_limit = int(min(max(4 * step_bytes, 16 << 20), 32 << 20))

    out = pl.pallas_call(
        functools.partial(plain_layer_kernel, img_w=W, k_pad=K_pad),
        out_shape=jax.ShapeDtypeStruct((Cout, N * HW), jnp.float32),
        grid_spec=pltpu.PrefetchScalarGridSpec(
            num_scalar_prefetch=0,
            grid=(grid,),
            in_specs=[
                pl.BlockSpec((Cin, BHW), lambda i: (0, i)),
                pl.BlockSpec((Cout, K_pad), lambda i: (0, 0)),
                pl.BlockSpec((Cin, 1), lambda i: (0, 0)),
                pl.BlockSpec((Cin, 1), lambda i: (0, 0)),
                pl.BlockSpec((9, BHW), lambda i: (0, 0)),
            ],
            out_specs=pl.BlockSpec((Cout, BHW), lambda i: (0, i)),
        ),
        compiler_params=pltpu.CompilerParams(
            dimension_semantics=("parallel",),   # batch axis -> both TCs on v7x
            vmem_limit_bytes=vmem_limit),
    )(x, w, scale, shift, tap_mask)

    # back to NCHW (cheap at these sizes)
    return out.reshape(Cout, N, HW).transpose(1, 0, 2).reshape(N, Cout, H, W)


def _reference(x_nchw, w_oihw, gamma, beta, rmean, rvar, eps=1e-5):
    """Pure-JAX f32 reference (eval-mode BN -> ReLU -> 3x3 conv, padding=1)."""
    scale = gamma / jnp.sqrt(rvar + eps)
    shift = beta - rmean * scale
    act = jnp.maximum(x_nchw * scale[None, :, None, None]
                      + shift[None, :, None, None], 0.0)
    return lax.conv_general_dilated(
        act, w_oihw, window_strides=(1, 1), padding=((1, 1), (1, 1)),
        dimension_numbers=("NCHW", "OIHW", "NCHW"))


if __name__ == "__main__":
    # Small shapes consistent with the module: N=2, Cin=4, H=W=16, Cout=8.
    N, Cin, H, W = 2, 4, 16, 16
    Cout = 8

    key = jax.random.PRNGKey(0)
    kx, kw = jax.random.split(key)

    x = jax.random.normal(kx, (N, Cin, H, W), dtype=jnp.float32)

    # Conv weight (OIHW), deterministic kaiming-ish init, no bias.
    fan_in = Cin * 3 * 3
    w = jax.random.normal(kw, (Cout, Cin, 3, 3), dtype=jnp.float32) / jnp.sqrt(fan_in)

    # BatchNorm2d params / running stats (deterministic).
    gamma = 1.0 + 0.10 * jnp.arange(Cin, dtype=jnp.float32)
    beta = -0.10 + 0.05 * jnp.arange(Cin, dtype=jnp.float32)
    rmean = 0.02 * jnp.arange(Cin, dtype=jnp.float32)
    rvar = 1.0 + 0.03 * jnp.arange(Cin, dtype=jnp.float32)

    out = plain_layer(x, w, gamma, beta, rmean, rvar)
    out = jax.block_until_ready(out)

    ref = jax.block_until_ready(_reference(x, w, gamma, beta, rmean, rvar))
    assert out.shape == (N, Cout, H, W), out.shape
    # Tolerance reflects bf16 MXU operands (f32 accumulation) vs the all-f32
    # reference; BN/ReLU/masking inside the kernel are exact (mask is 0/1).
    assert jnp.allclose(out, ref, atol=3e-2, rtol=3e-2), float(
        jnp.max(jnp.abs(out - ref)))

    print("KERNEL_OK")
</pallas_src>

<mosaic_0001>
module attributes {stable_mosaic.version = 11 : i64} {
  func.func @plain_layer_kernel(%arg0: i32, %arg1: memref<4x256xf32, #tpu.memory_space<vmem>>, %arg2: memref<8x40xbf16, #tpu.memory_space<vmem>>, %arg3: memref<4x1xf32, #tpu.memory_space<vmem>>, %arg4: memref<4x1xf32, #tpu.memory_space<vmem>>, %arg5: memref<9x256xbf16, #tpu.memory_space<vmem>>, %arg6: memref<8x256xf32, #tpu.memory_space<vmem>>) attributes {dimension_semantics = [#tpu.dimension_semantics<parallel>], iteration_bounds = array<i64: 2>, scalar_prefetch = 0 : i64, scratch_operands = 0 : i64, tpu.core_type = #tpu.core_type<tc>, window_params = [{transform_indices = @transform_0, window_bounds = array<i64: 4, 256>}, {pipeline_mode = #tpu.pipeline_mode<synchronous>, transform_indices = @transform_1, window_bounds = array<i64: 8, 40>}, {pipeline_mode = #tpu.pipeline_mode<synchronous>, transform_indices = @transform_2, window_bounds = array<i64: 4, 1>}, {pipeline_mode = #tpu.pipeline_mode<synchronous>, transform_indices = @transform_3, window_bounds = array<i64: 4, 1>}, {pipeline_mode = #tpu.pipeline_mode<synchronous>, transform_indices = @transform_4, window_bounds = array<i64: 9, 256>}, {transform_indices = @transform_5, window_bounds = array<i64: 8, 256>}]} {
    %c0 = arith.constant 0 : index
    %c0_0 = arith.constant 0 : index
    %0 = vector.load %arg1[%c0, %c0_0] : memref<4x256xf32, #tpu.memory_space<vmem>>, vector<4x256xf32>
    %c0_1 = arith.constant 0 : index
    %c0_2 = arith.constant 0 : index
    %1 = vector.load %arg3[%c0_1, %c0_2] : memref<4x1xf32, #tpu.memory_space<vmem>>, vector<4x1xf32>
    %2 = vector.broadcast %1 : vector<4x1xf32> to vector<4x256xf32>
    %3 = arith.mulf %0, %2 : vector<4x256xf32>
    %c0_3 = arith.constant 0 : index
    %c0_4 = arith.constant 0 : index
    %4 = vector.load %arg4[%c0_3, %c0_4] : memref<4x1xf32, #tpu.memory_space<vmem>>, vector<4x1xf32>
    %5 = vector.broadcast %4 : vector<4x1xf32> to vector<4x256xf32>
    %6 = arith.addf %3, %5 : vector<4x256xf32>
    %cst = arith.constant 0.000000e+00 : f32
    %7 = vector.broadcast %cst : f32 to vector<4x256xf32>
    %8 = arith.maximumf %6, %7 : vector<4x256xf32>
    %9 = arith.truncf %8 : vector<4x256xf32> to vector<4x256xbf16>
    %10 = vector.extract_strided_slice %9 {offsets = [0, 239], sizes = [4, 17], strides = [1, 1]} : vector<4x256xbf16> to vector<4x17xbf16>
    %11 = vector.extract_strided_slice %9 {offsets = [0, 0], sizes = [4, 239], strides = [1, 1]} : vector<4x256xbf16> to vector<4x239xbf16>
    %12 = tpu.concatenate %10, %11 in 1 : vector<4x17xbf16>, vector<4x239xbf16> -> vector<4x256xbf16>
    %c0_5 = arith.constant 0 : index
    %c0_6 = arith.constant 0 : index
    %13 = vector.load %arg5[%c0_5, %c0_6] : memref<9x256xbf16, #tpu.memory_space<vmem>>, vector<1x256xbf16>
    %14 = vector.broadcast %13 : vector<1x256xbf16> to vector<4x256xbf16>
    %15 = arith.mulf %12, %14 : vector<4x256xbf16>
    %16 = vector.extract_strided_slice %9 {offsets = [0, 240], sizes = [4, 16], strides = [1, 1]} : vector<4x256xbf16> to vector<4x16xbf16>
    %17 = vector.extract_strided_slice %9 {offsets = [0, 0], sizes = [4, 240], strides = [1, 1]} : vector<4x256xbf16> to vector<4x240xbf16>
    %18 = tpu.concatenate %16, %17 in 1 : vector<4x16xbf16>, vector<4x240xbf16> -> vector<4x256xbf16>
    %c1 = arith.constant 1 : index
    %c0_7 = arith.constant 0 : index
    %19 = vector.load %arg5[%c1, %c0_7] : memref<9x256xbf16, #tpu.memory_space<vmem>>, vector<1x256xbf16>
    %20 = vector.broadcast %19 : vector<1x256xbf16> to vector<4x256xbf16>
    %21 = arith.mulf %18, %20 : vector<4x256xbf16>
    %22 = vector.extract_strided_slice %9 {offsets = [0, 241], sizes = [4, 15], strides = [1, 1]} : vector<4x256xbf16> to vector<4x15xbf16>
    %23 = vector.extract_strided_slice %9 {offsets = [0, 0], sizes = [4, 241], strides = [1, 1]} : vector<4x256xbf16> to vector<4x241xbf16>
    %24 = tpu.concatenate %22, %23 in 1 : vector<4x15xbf16>, vector<4x241xbf16> -> vector<4x256xbf16>
    %c2 = arith.constant 2 : index
    %c0_8 = arith.constant 0 : index
    %25 = vector.load %arg5[%c2, %c0_8] : memref<9x256xbf16, #tpu.memory_space<vmem>>, vector<1x256xbf16>
    %26 = vector.broadcast %25 : vector<1x256xbf16> to vector<4x256xbf16>
    %27 = arith.mulf %24, %26 : vector<4x256xbf16>
    %28 = vector.extract_strided_slice %9 {offsets = [0, 255], sizes = [4, 1], strides = [1, 1]} : vector<4x256xbf16> to vector<4x1xbf16>
    %29 = vector.extract_strided_slice %9 {offsets = [0, 0], sizes = [4, 255], strides = [1, 1]} : vector<4x256xbf16> to vector<4x255xbf16>
    %30 = tpu.concatenate %28, %29 in 1 : vector<4x1xbf16>, vector<4x255xbf16> -> vector<4x256xbf16>
    %c3 = arith.constant 3 : index
    %c0_9 = arith.constant 0 : index
    %31 = vector.load %arg5[%c3, %c0_9] : memref<9x256xbf16, #tpu.memory_space<vmem>>, vector<1x256xbf16>
    %32 = vector.broadcast %31 : vector<1x256xbf16> to vector<4x256xbf16>
    %33 = arith.mulf %30, %32 : vector<4x256xbf16>
    %c4 = arith.constant 4 : index
    %c0_10 = arith.constant 0 : index
    %34 = vector.load %arg5[%c4, %c0_10] : memref<9x256xbf16, #tpu.memory_space<vmem>>, vector<1x256xbf16>
    %35 = vector.broadcast %34 : vector<1x256xbf16> to vector<4x256xbf16>
    %36 = arith.mulf %9, %35 : vector<4x256xbf16>
    %37 = vector.extract_strided_slice %9 {offsets = [0, 1], sizes = [4, 255], strides = [1, 1]} : vector<4x256xbf16> to vector<4x255xbf16>
    %38 = vector.extract_strided_slice %9 {offsets = [0, 0], sizes = [4, 1], strides = [1, 1]} : vector<4x256xbf16> to vector<4x1xbf16>
    %39 = tpu.concatenate %37, %38 in 1 : vector<4x255xbf16>, vector<4x1xbf16> -> vector<4x256xbf16>
    %c5 = arith.constant 5 : index
    %c0_11 = arith.constant 0 : index
    %40 = vector.load %arg5[%c5, %c0_11] : memref<9x256xbf16, #tpu.memory_space<vmem>>, vector<1x256xbf16>
    %41 = vector.broadcast %40 : vector<1x256xbf16> to vector<4x256xbf16>
    %42 = arith.mulf %39, %41 : vector<4x256xbf16>
    %43 = vector.extract_strided_slice %9 {offsets = [0, 15], sizes = [4, 241], strides = [1, 1]} : vector<4x256xbf16> to vector<4x241xbf16>
    %44 = vector.extract_strided_slice %9 {offsets = [0, 0], sizes = [4, 15], strides = [1, 1]} : vector<4x256xbf16> to vector<4x15xbf16>
    %45 = tpu.concatenate %43, %44 in 1 : vector<4x241xbf16>, vector<4x15xbf16> -> vector<4x256xbf16>
    %c6 = arith.constant 6 : index
    %c0_12 = arith.constant 0 : index
    %46 = vector.load %arg5[%c6, %c0_12] : memref<9x256xbf16, #tpu.memory_space<vmem>>, vector<1x256xbf16>
    %47 = vector.broadcast %46 : vector<1x256xbf16> to vector<4x256xbf16>
    %48 = arith.mulf %45, %47 : vector<4x256xbf16>
    %49 = vector.extract_strided_slice %9 {offsets = [0, 16], sizes = [4, 240], strides = [1, 1]} : vector<4x256xbf16> to vector<4x240xbf16>
    %50 = vector.extract_strided_slice %9 {offsets = [0, 0], sizes = [4, 16], strides = [1, 1]} : vector<4x256xbf16> to vector<4x16xbf16>
    %51 = tpu.concatenate %49, %50 in 1 : vector<4x240xbf16>, vector<4x16xbf16> -> vector<4x256xbf16>
    %c7 = arith.constant 7 : index
    %c0_13 = arith.constant 0 : index
    %52 = vector.load %arg5[%c7, %c0_13] : memref<9x256xbf16, #tpu.memory_space<vmem>>, vector<1x256xbf16>
    %53 = vector.broadcast %52 : vector<1x256xbf16> to vector<4x256xbf16>
    %54 = arith.mulf %51, %53 : vector<4x256xbf16>
    %55 = vector.extract_strided_slice %9 {offsets = [0, 17], sizes = [4, 239], strides = [1, 1]} : vector<4x256xbf16> to vector<4x239xbf16>
    %56 = vector.extract_strided_slice %9 {offsets = [0, 0], sizes = [4, 17], strides = [1, 1]} : vector<4x256xbf16> to vector<4x17xbf16>
    %57 = tpu.concatenate %55, %56 in 1 : vector<4x239xbf16>, vector<4x17xbf16> -> vector<4x256xbf16>
    %c8 = arith.constant 8 : index
    %c0_14 = arith.constant 0 : index
    %58 = vector.load %arg5[%c8, %c0_14] : memref<9x256xbf16, #tpu.memory_space<vmem>>, vector<1x256xbf16>
    %59 = vector.broadcast %58 : vector<1x256xbf16> to vector<4x256xbf16>
    %60 = arith.mulf %57, %59 : vector<4x256xbf16>
    %cst_15 = arith.constant 0.000000e+00 : bf16
    %61 = vector.broadcast %cst_15 : bf16 to vector<4x256xbf16>
    %62 = tpu.concatenate %15, %21, %27, %33, %36, %42, %48, %54, %60, %61 in 0 : vector<4x256xbf16>, vector<4x256xbf16>, vector<4x256xbf16>, vector<4x256xbf16>, vector<4x256xbf16>, vector<4x256xbf16>, vector<4x256xbf16>, vector<4x256xbf16>, vector<4x256xbf16>, vector<4x256xbf16> -> vector<40x256xbf16>
    %c0_16 = arith.constant 0 : index
    %c0_17 = arith.constant 0 : index
    %63 = vector.load %arg2[%c0_16, %c0_17] : memref<8x40xbf16, #tpu.memory_space<vmem>>, vector<8x40xbf16>
    %cst_18 = arith.constant dense<0.000000e+00> : vector<8x256xf32>
    %64 = tpu.matmul %63, %62, %cst_18 {dimension_numbers = #tpu.dot_dimension_numbers<[1], [0], [0], [1], [0, 0, 1, 1], [], []>} : vector<8x40xbf16>, vector<40x256xbf16>, vector<8x256xf32> -> vector<8x256xf32>
    %c0_19 = arith.constant 0 : index
    %c0_20 = arith.constant 0 : index
    %65 = vector.load %arg6[%c0_19, %c0_20] : memref<8x256xf32, #tpu.memory_space<vmem>>, vector<8x256xf32>
    tpu.vector_store %arg6[%c0_19, %c0_20], %64 {strides = array<i32>} : memref<8x256xf32, #tpu.memory_space<vmem>>, vector<8x256xf32>,
    return
  }
  func.func @transform_0(%arg0: i32) -> (i32, i32) {
    %c0_i32 = arith.constant 0 : i32
    %c0_i32_0 = arith.constant 0 : i32
    return %c0_i32, %arg0 : i32, i32
  }
  func.func @transform_1(%arg0: i32) -> (i32, i32) {
    %c0_i32 = arith.constant 0 : i32
    %c0_i32_0 = arith.constant 0 : i32
    %c0_i32_1 = arith.constant 0 : i32
    return %c0_i32, %c0_i32_0 : i32, i32
  }
  func.func @transform_2(%arg0: i32) -> (i32, i32) {
    %c0_i32 = arith.constant 0 : i32
    %c0_i32_0 = arith.constant 0 : i32
    %c0_i32_1 = arith.constant 0 : i32
    return %c0_i32, %c0_i32_0 : i32, i32
  }
  func.func @transform_3(%arg0: i32) -> (i32, i32) {
    %c0_i32 = arith.constant 0 : i32
    %c0_i32_0 = arith.constant 0 : i32
    %c0_i32_1 = arith.constant 0 : i32
    return %c0_i32, %c0_i32_0 : i32, i32
  }
  func.func @transform_4(%arg0: i32) -> (i32, i32) {
    %c0_i32 = arith.constant 0 : i32
    %c0_i32_0 = arith.constant 0 : i32
    %c0_i32_1 = arith.constant 0 : i32
    return %c0_i32, %c0_i32_0 : i32, i32
  }
  func.func @transform_5(%arg0: i32) -> (i32, i32) {
    %c0_i32 = arith.constant 0 : i32
    %c0_i32_0 = arith.constant 0 : i32
    return %c0_i32, %arg0 : i32, i32
  }
}

</mosaic_0001>

<llo_original>
// kernel: plain_layer.1
$region0: #{plain_layer.1}
  #allocation0 [shape = 'u32[]', space=smem, size = 0x4, offset = 0x4, fixed_abs, tag = 'smem constant byte address 0x4 - core index']
  #allocation1 [shape = 'u32[144,128]{1,0:T(1,128)}', space=vmem, size = 0x12000, scoped, tag = 'internal scratch']
  %s0 = inlined_call_operand.vmem [shape: f32[4,512], index: 0, kind: input, shape index: {}]
  %s1 = inlined_call_operand.vmem [shape: bf16[8,40], index: 1, kind: input, shape index: {}]
  %s2 = inlined_call_operand.vmem [shape: f32[4,1], index: 2, kind: input, shape index: {}]
  %s3 = inlined_call_operand.vmem [shape: f32[4,1], index: 3, kind: input, shape index: {}]
  %s4 = inlined_call_operand.vmem [shape: bf16[9,256], index: 4, kind: input, shape index: {}]
  %s5 = inlined_call_operand.vmem [shape: f32[8,512], index: 5, kind: output, shape index: {}]
  %s6 = sld [smem:[#allocation0]]
  $region53: #{plain_layer.1} parent=0
    _
  %s8 = ssub.s32 1, %s6
  %s9 = scalar_select 0, %s8, %s6
  loop: start=0, step=1, limit=4
  $region2: #{plain_layer.1} parent=0 // loop_pre_header
    _
  $region3: #{plain_layer.1} parent=0 // loop_header
    %s11 = sphi 0, %s15
    %p12 = scmp.ge.s32.totalorder %s11, 4
    %s21 = sphi 0, %s23
    %s24 = sphi 0, %s21
    %s25 = sphi 0, %s24
    %s41 = sphi 0, %s25
    %s45 = sphi 0, %s45
    %s47 = sphi 0, %s45
    %s48 = sphi 0, %s47
    %s62 = sphi 0, %s48
    %s66 = sphi 0, %s66
    %s68 = sphi 0, %s66
    %s69 = sphi 0, %s68
    %s83 = sphi 0, %s69
    %s87 = sphi 0, %s87
    %s89 = sphi 0, %s87
    %s90 = sphi 0, %s89
    %s104 = sphi 0, %s90
    %s108 = sphi 0, %s108
    %s110 = sphi 0, %s108
    %s111 = sphi 0, %s110
    %s125 = sphi 0, %s111
    %s131 = sphi 0, %s133
    %s134 = sphi 0, %s131
    %s135 = sphi 0, %s134
    %s151 = sphi 0, %s135
  $region4: #{plain_layer.1} parent=0 // loop_header_branch
    %14 = sbr.rel (%p12) target = $region8
  $region5: #{plain_layer.1} parent=0 // loop_body
    %s16 = ssub.s32 %s11, 1
    %s17 = ssub.s32 %s11, 2
    %s18 = sadd.s32 %s11, 1
    %s19 = ssub.s32 %s11, %s18
    %p20 = scmp.eq.s32.totalorder %s19, 0
    %s22 = sadd.s32 %s21, 1
    %s23 = scalar_select %p20, %s21, %s22
    %p26 = pneg %p20
    %p27 = scmp.eq.s32.totalorder %s11, 1
    %p28 = por %p26, %p27
    %p29 = scmp.ne.s32.totalorder %s21, %s24
    %p30 = scmp.eq.s32.totalorder %s11, 0
    %p31 = por %p29, %p30
    %p32 = scmp.ne.s32.totalorder %s21, %s24
    %p33 = scmp.eq.s32.totalorder %s16, 1
    %p34 = por %p32, %p33
    %p35 = scmp.ne.s32.totalorder %s24, %s25
    %p36 = scmp.eq.s32.totalorder %s16, 0
    %p37 = por %p35, %p36
    %p38 = scmp.ne.s32.totalorder %s24, %s25
    %p39 = scmp.eq.s32.totalorder %s17, 1
    %p40 = por %p38, %p39
    %p42 = scmp.ne.s32.totalorder %s25, %s41
    %p43 = scmp.eq.s32.totalorder %s17, 0
    %p44 = por %p42, %p43
    %s46 = sadd.s32 %s45, 1
    %p49 = scmp.eq.s32.totalorder %s11, 1
    %p50 = scmp.ne.s32.totalorder %s45, %s47
    %p51 = scmp.eq.s32.totalorder %s11, 0
    %p52 = por %p50, %p51
    %p53 = scmp.ne.s32.totalorder %s45, %s47
    %p54 = scmp.eq.s32.totalorder %s16, 1
    %p55 = por %p53, %p54
    %p56 = scmp.ne.s32.totalorder %s47, %s48
    %p57 = scmp.eq.s32.totalorder %s16, 0
    %p58 = por %p56, %p57
    %p59 = scmp.ne.s32.totalorder %s47, %s48
    %p60 = scmp.eq.s32.totalorder %s17, 1
    %p61 = por %p59, %p60
    %p63 = scmp.ne.s32.totalorder %s48, %s62
    %p64 = scmp.eq.s32.totalorder %s17, 0
    %p65 = por %p63, %p64
    %s67 = sadd.s32 %s66, 1
    %p70 = scmp.eq.s32.totalorder %s11, 1
    %p71 = scmp.ne.s32.totalorder %s66, %s68
    %p72 = scmp.eq.s32.totalorder %s11, 0
    %p73 = por %p71, %p72
    %p74 = scmp.ne.s32.totalorder %s66, %s68
    %p75 = scmp.eq.s32.totalorder %s16, 1
    %p76 = por %p74, %p75
    %p77 = scmp.ne.s32.totalorder %s68, %s69
    %p78 = scmp.eq.s32.totalorder %s16, 0
    %p79 = por %p77, %p78
    %p80 = scmp.ne.s32.totalorder %s68, %s69
    %p81 = scmp.eq.s32.totalorder %s17, 1
    %p82 = por %p80, %p81
    %p84 = scmp.ne.s32.totalorder %s69, %s83
    %p85 = scmp.eq.s32.totalorder %s17, 0
    %p86 = por %p84, %p85
    %s88 = sadd.s32 %s87, 1
    %p91 = scmp.eq.s32.totalorder %s11, 1
    %p92 = scmp.ne.s32.totalorder %s87, %s89
    %p93 = scmp.eq.s32.totalorder %s11, 0
    %p94 = por %p92, %p93
    %p95 = scmp.ne.s32.totalorder %s87, %s89
    %p96 = scmp.eq.s32.totalorder %s16, 1
    %p97 = por %p95, %p96
    %p98 = scmp.ne.s32.totalorder %s89, %s90
    %p99 = scmp.eq.s32.totalorder %s16, 0
    %p100 = por %p98, %p99
    %p101 = scmp.ne.s32.totalorder %s89, %s90
    %p102 = scmp.eq.s32.totalorder %s17, 1
    %p103 = por %p101, %p102
    %p105 = scmp.ne.s32.totalorder %s90, %s104
    %p106 = scmp.eq.s32.totalorder %s17, 0
    %p107 = por %p105, %p106
    %s109 = sadd.s32 %s108, 1
    %p112 = scmp.eq.s32.totalorder %s11, 1
    %p113 = scmp.ne.s32.totalorder %s108, %s110
    %p114 = scmp.eq.s32.totalorder %s11, 0
    %p115 = por %p113, %p114
    %p116 = scmp.ne.s32.totalorder %s108, %s110
    %p117 = scmp.eq.s32.totalorder %s16, 1
    %p118 = por %p116, %p117
    %p119 = scmp.ne.s32.totalorder %s110, %s111
    %p120 = scmp.eq.s32.totalorder %s16, 0
    %p121 = por %p119, %p120
    %p122 = scmp.ne.s32.totalorder %s110, %s111
    %p123 = scmp.eq.s32.totalorder %s17, 1
    %p124 = por %p122, %p123
    %p126 = scmp.ne.s32.totalorder %s111, %s125
    %p127 = scmp.eq.s32.totalorder %s17, 0
    %p128 = por %p126, %p127
    %s129 = ssub.s32 %s11, %s18
    %p130 = scmp.eq.s32.totalorder %s129, 0
    %s132 = sadd.s32 %s131, 1
    %s133 = scalar_select %p130, %s131, %s132
    %p136 = pneg %p130
    %p137 = scmp.eq.s32.totalorder %s11, 1
    %p138 = por %p136, %p137
    %p139 = scmp.ne.s32.totalorder %s131, %s134
    %p140 = scmp.eq.s32.totalorder %s11, 0
    %p141 = por %p139, %p140
    %p142 = scmp.ne.s32.totalorder %s131, %s134
    %p143 = scmp.eq.s32.totalorder %s16, 1
    %p144 = por %p142, %p143
    %p145 = scmp.ne.s32.totalorder %s134, %s135
    %p146 = scmp.eq.s32.totalorder %s16, 0
    %p147 = por %p145, %p146
    %p148 = scmp.ne.s32.totalorder %s134, %s135
    %p149 = scmp.eq.s32.totalorder %s17, 1
    %p150 = por %p148, %p149
    %p152 = scmp.ne.s32.totalorder %s135, %s151
    %p153 = scmp.eq.s32.totalorder %s17, 0
    %p154 = por %p152, %p153
    %p155 = scmp.le.s32.totalorder 1, %s11
    %p156 = scmp.lt.s32.totalorder %s11, 3
    %p157 = pnand %p155, %p156
    %p158 = pneg %p157
    // Predicated region
    $region9: #{plain_layer.1} parent=5 // pred_check
      _
    $region10: #{plain_layer.1} parent=5 // pred_check_branch
      %160 = sbr.rel (%p157) target = $region12
    $region11: #{plain_layer.1} parent=5 // pred_region
      %s161 = ssub.s32 %s11, 1
      // Predicated region
      $region13: #{plain_layer.1} parent=11 // pred_check
        %p162 = pneg %p58
      $region14: #{plain_layer.1} parent=11 // pred_check_branch
        %164 = sbr.rel (%p162) target = $region16
      $region15: #{plain_layer.1} parent=11 // pred_region
        _
      $region16: #{plain_layer.1} parent=11 // pred_fallthru
        _
      // Predicated region
      $region17: #{plain_layer.1} parent=11 // pred_check
        %p165 = pneg %p79
      $region18: #{plain_layer.1} parent=11 // pred_check_branch
        %167 = sbr.rel (%p165) target = $region20
      $region19: #{plain_layer.1} parent=11 // pred_region
        _
      $region20: #{plain_layer.1} parent=11 // pred_fallthru
        _
      // Predicated region
      $region21: #{plain_layer.1} parent=11 // pred_check
        %p168 = pneg %p100
      $region22: #{plain_layer.1} parent=11 // pred_check_branch
        %170 = sbr.rel (%p168) target = $region24
      $region23: #{plain_layer.1} parent=11 // pred_region
        _
      $region24: #{plain_layer.1} parent=11 // pred_fallthru
        _
      // Predicated region
      $region25: #{plain_layer.1} parent=11 // pred_check
        %p171 = pneg %p121
      $region26: #{plain_layer.1} parent=11 // pred_check_branch
        %173 = sbr.rel (%p171) target = $region28
      $region27: #{plain_layer.1} parent=11 // pred_region
        _
      $region28: #{plain_layer.1} parent=11 // pred_fallthru
        _
    $region12: #{plain_layer.1} parent=5 // pred_fallthru
      _
    %p174 = scmp.lt.s32.totalorder %s11, 2
    // Predicated region
    $region29: #{plain_layer.1} parent=5 // pred_check
      %p175 = pneg %p174
    $region30: #{plain_layer.1} parent=5 // pred_check_branch
      %177 = sbr.rel (%p175) target = $region32
    $region31: #{plain_layer.1} parent=5 // pred_region
      // Predicated region
      $region33: #{plain_layer.1} parent=31 // pred_check
        %p178 = pneg %p31
      $region34: #{plain_layer.1} parent=31 // pred_check_branch
        %180 = sbr.rel (%p178) target = $region36
      $region35: #{plain_layer.1} parent=31 // pred_region
        %s181 = smul.u32 2, %s11
        %p182 = scmp.lt.s32.totalorder %s181, 3
        %s183 = scalar_select %p182, %s181, 3
        %s184 = smul.addr %s183, 4
        %s185 = scalar_lea.vmem %s0, %s184
        %s186 = smul.u32 2, %s11
      $region36: #{plain_layer.1} parent=31 // pred_fallthru
        _
    $region32: #{plain_layer.1} parent=5 // pred_fallthru
      _
    %p187 = scmp.le.s32.totalorder 1, %s11
    %p188 = scmp.lt.s32.totalorder %s11, 3
    %p189 = pnand %p187, %p188
    %p190 = pneg %p189
    // Predicated region
    $region37: #{plain_layer.1} parent=5 // pred_check
      _
    $region38: #{plain_layer.1} parent=5 // pred_check_branch
      %192 = sbr.rel (%p189) target = $region40
    $region39: #{plain_layer.1} parent=5 // pred_region
      %s193 = ssub.s32 %s11, 1
      %s194 = smul.u32 2, %s16
      %p195 = scmp.lt.s32.totalorder %s194, 3
      %s196 = scalar_select %p195, %s194, 3
      %s197 = smul.addr %s196, 4
      %s198 = scalar_lea.vmem %s0, %s197
      %p199 = pneg %p37
      %p200 = pneg %p34
      %p201 = pneg %p58
      %p202 = pneg %p55
      %p203 = pneg %p79
      %p204 = pneg %p76
      %p205 = pneg %p100
      %p206 = pneg %p97
      %p207 = pneg %p121
      %p208 = pneg %p118
      %p209 = pneg %p147
      %p210 = pneg %p144
      %s211 = smul.u32 2, %s16
      %p212 = scmp.lt.s32.totalorder %s211, 3
      %s213 = scalar_select %p212, %s211, 3
      %s214 = smul.addr %s213, 8
      %s215 = scalar_lea.vmem %s5, %s214
      %s216 = smul.u32 2, %s16
      %p217 = scmp.lt.s32.totalorder %s216, 3
      %s218 = scalar_select %p217, %s216, 3
      %s219 = smul.addr %s218, 4
      %s220 = scalar_lea.vmem %s0, %s219
      %s221 = smul.u32 2, %s16
      %s222 = smul.u32 2, %s16
      %p223 = scmp.lt.s32.totalorder %s222, 3
      %s224 = scalar_select %p223, %s222, 3
      %s225 = smul.addr %s224, 8
      %s226 = scalar_lea.vmem %s5, %s225
      %s227 = smul.u32 2, %s16
      %v229 = vld [vmem:[%s220] sm:$0xff]
      %v230 = vld [vmem:[%s2] sm:$0xf]
      %232 = vset.pattern.permute.xlu0 0
      %233 = vperm.xlu0 %232, %v230
      %v234 = vpop.permute.xlu0 %233
      %v236 = vunpack.c.l.s4 839922192
      %v237 = vunpack.c.0.s8 %v236
      %v238 = vlaneseq
      %v239 = vshrl.u32 %v238, 7
      %v240 = vsub.s32 %v237, %v239
      %v241 = vrot.slane %v234, %v240
      %v243 = vmul.f32 %v229, %v241
      %v244 = vld [vmem:[%s3] sm:$0xf]
      %246 = vset.pattern.permute.xlu0 0
      %247 = vperm.xlu0 %246, %v244
      %v248 = vpop.permute.xlu0 %247
      %v250 = vunpack.c.l.s4 839922192
      %v251 = vunpack.c.0.s8 %v250
      %v252 = vlaneseq
      %v253 = vshrl.u32 %v252, 7
      %v254 = vsub.s32 %v251, %v253
      %v255 = vrot.slane %v248, %v254
      %v257 = vadd.f32 %v243, %v255
      %v258 = vmax.f32 %v257, 0.0
      %v260 = vcombine.high %v258, %v258
      %v262 = vpack.c.bf16 %v258, %v258
      %v263 = vpack.c.bf16 %v260, %v260
      %265 = vrot.lane.b32.xlu0 %v263, 17
      %v266 = vpop.permute.xlu0 %265
      %268 = vrot.lane.b32.xlu0 %v262, 17
      %v269 = vpop.permute.xlu0 %268
      %vm270 = vcmask 138240
      %v271 = vsel %vm270, %v269, %v266
      %vm273 = vcmask 138240
      %v276 = vsel %vm273, %v266, %v269
      %v278 = vld [vmem:[%s4] sm:$0x11]
      %v280 = vunpack.c.l.b16 %v278
      %v281 = vunpack.c.h.b16 %v278
      %v282 = vpack.c.b16 %v280, %v280
      %v283 = vpack.c.b16 %v281, %v281
      %v285 = vpack.i.b16 %v282, %v282
      %v287 = vlaneseq
      %v288 = vshrl.u32 %v287, 7
      %v289 = vsub.s32 0, %v288
      %v290 = vrot.slane %v285, %v289
      %v292 = vpack.i.b16 %v283, %v283
      %v294 = vlaneseq
      %v295 = vshrl.u32 %v294, 7
      %v296 = vsub.s32 0, %v295
      %v297 = vrot.slane %v292, %v296
      %v298 = vmul.bf16 %v276, %v290
      %v299 = vmul.bf16 %v271, %v297
      %300 = vrot.lane.b32.xlu0 %v263, 16
      %v301 = vpop.permute.xlu0 %300
      %302 = vrot.lane.b32.xlu0 %v262, 16
      %v303 = vpop.permute.xlu0 %302
      %vm304 = vcmask 130048
      %v305 = vsel %vm304, %v303, %v301
      %vm307 = vcmask 130048
      %v310 = vsel %vm307, %v301, %v303
      %v312 = vshrl.u32 %v282, 16
      %v313 = vpack.i.b16 %v312, %v312
      %v315 = vlaneseq
      %v316 = vshrl.u32 %v315, 7
      %v317 = vsub.s32 0, %v316
      %v318 = vrot.slane %v313, %v317
      %v319 = vshrl.u32 %v283, 16
      %v320 = vpack.i.b16 %v319, %v319
      %v322 = vlaneseq
      %v323 = vshrl.u32 %v322, 7
      %v324 = vsub.s32 0, %v323
      %v325 = vrot.slane %v320, %v324
      %v326 = vmul.bf16 %v310, %v318
      %v327 = vmul.bf16 %v305, %v325
      %328 = vrot.lane.b32.xlu0 %v263, 15
      %v329 = vpop.permute.xlu0 %328
      %330 = vrot.lane.b32.xlu0 %v262, 15
      %v331 = vpop.permute.xlu0 %330
      %vm332 = vcmask 121856
      %v333 = vsel %vm332, %v331, %v329
      %vm335 = vcmask 121856
      %v338 = vsel %vm335, %v329, %v331
      %v340 = vld [vmem:[%s4] sm:$0x22]
      %v342 = vunpack.c.l.b16 %v340
      %v343 = vunpack.c.h.b16 %v340
      %v344 = vpack.c.b16 %v342, %v342
      %v345 = vpack.c.b16 %v343, %v343
      %v347 = vpack.i.b16 %v344, %v344
      %v349 = vlaneseq
      %v350 = vshrl.u32 %v349, 7
      %v351 = vsub.s32 1, %v350
      %v352 = vrot.slane %v347, %v351
      %v354 = vpack.i.b16 %v345, %v345
      %v356 = vlaneseq
      %v357 = vshrl.u32 %v356, 7
      %v358 = vsub.s32 1, %v357
      %v359 = vrot.slane %v354, %v358
      %v360 = vmul.bf16 %v338, %v352
      %v361 = vmul.bf16 %v333, %v359
      %362 = vrot.lane.b32.xlu0 %v263, 1
      %v363 = vpop.permute.xlu0 %362
      %364 = vrot.lane.b32.xlu0 %v262, 1
      %v365 = vpop.permute.xlu0 %364
      %vm366 = vcmask 7168
      %v367 = vsel %vm366, %v365, %v363
      %vm369 = vcmask 7168
      %v372 = vsel %vm369, %v363, %v365
      %v374 = vshrl.u32 %v344, 16
      %v375 = vpack.i.b16 %v374, %v374
      %v377 = vlaneseq
      %v378 = vshrl.u32 %v377, 7
      %v379 = vsub.s32 1, %v378
      %v380 = vrot.slane %v375, %v379
      %v381 = vshrl.u32 %v345, 16
      %v382 = vpack.i.b16 %v381, %v381
      %v384 = vlaneseq
      %v385 = vshrl.u32 %v384, 7
      %v386 = vsub.s32 1, %v385
      %v387 = vrot.slane %v382, %v386
      %v388 = vmul.bf16 %v372, %v380
      %v389 = vmul.bf16 %v367, %v387
      %v390 = vld [vmem:[%s4] sm:$0x44]
      %v392 = vunpack.c.l.b16 %v390
      %v393 = vunpack.c.h.b16 %v390
      %v394 = vpack.c.b16 %v392, %v392
      %v395 = vpack.c.b16 %v393, %v393
      %v397 = vpack.i.b16 %v394, %v394
      %v399 = vlaneseq
      %v400 = vshrl.u32 %v399, 7
      %v401 = vsub.s32 2, %v400
      %v402 = vrot.slane %v397, %v401
      %v404 = vpack.i.b16 %v395, %v395
      %v406 = vlaneseq
      %v407 = vshrl.u32 %v406, 7
      %v408 = vsub.s32 2, %v407
      %v409 = vrot.slane %v404, %v408
      %v410 = vmul.bf16 %v262, %v402
      %v411 = vmul.bf16 %v263, %v409
      %412 = vrot.lane.b32.xlu0 %v262, 127
      %v413 = vpop.permute.xlu0 %412
      %414 = vrot.lane.b32.xlu0 %v263, 127
      %v415 = vpop.permute.xlu0 %414
      %vm416 = vcmask 1039360
      %v417 = vsel %vm416, %v413, %v415
      %vm419 = vcmask 1039360
      %v422 = vsel %vm419, %v415, %v413
      %v424 = vshrl.u32 %v394, 16
      %v425 = vpack.i.b16 %v424, %v424
      %v427 = vlaneseq
      %v428 = vshrl.u32 %v427, 7
      %v429 = vsub.s32 2, %v428
      %v430 = vrot.slane %v425, %v429
      %v431 = vshrl.u32 %v395, 16
      %v432 = vpack.i.b16 %v431, %v431
      %v434 = vlaneseq
      %v435 = vshrl.u32 %v434, 7
      %v436 = vsub.s32 2, %v435
      %v437 = vrot.slane %v432, %v436
      %v438 = vmul.bf16 %v417, %v430
      %v439 = vmul.bf16 %v422, %v437
      %440 = vrot.lane.b32.xlu0 %v262, 113
      %v441 = vpop.permute.xlu0 %440
      %442 = vrot.lane.b32.xlu0 %v263, 113
      %v443 = vpop.permute.xlu0 %442
      %vm444 = vcmask 924672
      %v445 = vsel %vm444, %v441, %v443
      %vm447 = vcmask 924672
      %v450 = vsel %vm447, %v443, %v441
      %v452 = vld [vmem:[%s4] sm:$0x88]
      %v454 = vunpack.c.l.b16 %v452
      %v455 = vunpack.c.h.b16 %v452
      %v456 = vpack.c.b16 %v454, %v454
      %v457 = vpack.c.b16 %v455, %v455
      %v459 = vpack.i.b16 %v456, %v456
      %v461 = vlaneseq
      %v462 = vshrl.u32 %v461, 7
      %v463 = vsub.s32 3, %v462
      %v464 = vrot.slane %v459, %v463
      %v466 = vpack.i.b16 %v457, %v457
      %v468 = vlaneseq
      %v469 = vshrl.u32 %v468, 7
      %v470 = vsub.s32 3, %v469
      %v471 = vrot.slane %v466, %v470
      %v472 = vmul.bf16 %v445, %v464
      %v473 = vmul.bf16 %v450, %v471
      %474 = vrot.lane.b32.xlu0 %v262, 112
      %v475 = vpop.permute.xlu0 %474
      %476 = vrot.lane.b32.xlu0 %v263, 112
      %v477 = vpop.permute.xlu0 %476
      %vm478 = vcmask 916480
      %v479 = vsel %vm478, %v475, %v477
      %vm481 = vcmask 916480
      %v484 = vsel %vm481, %v477, %v475
      %v486 = vshrl.u32 %v456, 16
      %v487 = vpack.i.b16 %v486, %v486
      %v489 = vlaneseq
      %v490 = vshrl.u32 %v489, 7
      %v491 = vsub.s32 3, %v490
      %v492 = vrot.slane %v487, %v491
      %v493 = vshrl.u32 %v457, 16
      %v494 = vpack.i.b16 %v493, %v493
      %v496 = vlaneseq
      %v497 = vshrl.u32 %v496, 7
      %v498 = vsub.s32 3, %v497
      %v499 = vrot.slane %v494, %v498
      %v500 = vmul.bf16 %v479, %v492
      %v501 = vmul.bf16 %v484, %v499
      %502 = vrot.lane.b32.xlu0 %v262, 111
      %v503 = vpop.permute.xlu0 %502
      %504 = vrot.lane.b32.xlu0 %v263, 111
      %v505 = vpop.permute.xlu0 %504
      %vm506 = vcmask 908288
      %v507 = vsel %vm506, %v503, %v505
      %vm509 = vcmask 908288
      %v512 = vsel %vm509, %v505, %v503
      %v514 = vld [vmem:[%s4 + $0x8] sm:$0x11]
      %v516 = vunpack.c.l.b16 %v514
      %v517 = vunpack.c.h.b16 %v514
      %v518 = vpack.c.b16 %v516, %v516
      %v519 = vpack.c.b16 %v517, %v517
      %v521 = vpack.i.b16 %v518, %v518
      %v523 = vlaneseq
      %v524 = vshrl.u32 %v523, 7
      %v525 = vsub.s32 0, %v524
      %v526 = vrot.slane %v521, %v525
      %v528 = vpack.i.b16 %v519, %v519
      %v530 = vlaneseq
      %v531 = vshrl.u32 %v530, 7
      %v532 = vsub.s32 0, %v531
      %v533 = vrot.slane %v528, %v532
      %v534 = vmul.bf16 %v507, %v526
      %v535 = vmul.bf16 %v512, %v533
      %v538 = vrot.slane %v326, 6
      %v539 = vrot.slane %v327, 6
      %v542 = vrot.slane %v360, 4
      %v543 = vrot.slane %v361, 4
      %v546 = vrot.slane %v388, 2
      %v547 = vrot.slane %v389, 2
      %v550 = vrot.slane %v438, 6
      %v551 = vrot.slane %v439, 6
      %v554 = vrot.slane %v472, 4
      %v555 = vrot.slane %v473, 4
      %v558 = vrot.slane %v500, 2
      %v559 = vrot.slane %v501, 2
      %vm560 = vcmask 1041408
      %v563 = vsel %vm560, %v298, %v538
      %v566 = vsel %vm560, %v299, %v539
      %vm567 = vcmask 1043456
      %v569 = vsel %vm567, %v563, %v542
      %v571 = vsel %vm567, %v566, %v543
      %vm572 = vcmask 1045504
      %v574 = vsel %vm572, %v569, %v546
      %v577 = vsel %vm572, %v571, %v547
      %v581 = vsel %vm560, %v410, %v550
      %v584 = vsel %vm560, %v411, %v551
      %v586 = vsel %vm567, %v581, %v554
      %v588 = vsel %vm567, %v584, %v555
      %v590 = vsel %vm572, %v586, %v558
      %v593 = vsel %vm572, %v588, %v559
      %v597 = vsel %vm560, %v534, 0
      %v599 = vsel %vm560, %v535, 0
      %v600 = vld [vmem:[%s1] sm:$0xf]
      %vm601 = vcmask 326656
      %v603 = vsel %vm601, %v600, 0
      %v605 = vsel %vm567, %v597, 0
      %v607 = vsel %vm567, %v599, 0
      %609 = vmatprep.subr.bf16.mxu0 %v577
      %610 = vmatpush1.bf16.msra.mxu0 %v574
      %611 = vmatprep.subr.bf16.mxu0 %v593
      %612 = vmatpush1.bf16.msra.mxu0 %v590
      %613 = vmatprep.subr.bf16.mxu0 %v607
      %614 = vmatpush1.bf16.msra.mxu0 %v605
      %615 = vmatprep.subr.bf16.mxu0 0
      %616 = vmatpush1.bf16.msra.mxu0 0
      %617 = vmatprep.subr.bf16.mxu0 0
      %618 = vmatpush1.bf16.msra.mxu0 0
      %619 = vmatprep.subr.bf16.mxu0 0
      %620 = vmatpush1.bf16.msra.mxu0 0
      %621 = vmatprep.subr.bf16.mxu0 0
      %622 = vmatpush1.bf16.msra.mxu0 0
      %623 = vmatprep.subr.bf16.mxu0 0
      %624 = vmatpush1.bf16.msra.mxu0 0
      %625 = vmatprep.subr.bf16.mxu0 0
      %626 = vmatpush1.bf16.msra.mxu0 0
      %627 = vmatprep.subr.bf16.mxu0 0
      %628 = vmatpush1.bf16.msra.mxu0 0
      %629 = vmatprep.subr.bf16.mxu0 0
      %630 = vmatpush1.bf16.msra.mxu0 0
      %631 = vmatprep.subr.bf16.mxu0 0
      %632 = vmatpush1.bf16.msra.mxu0 0
      %633 = vmatprep.subr.bf16.mxu0 0
      %634 = vmatpush1.bf16.msra.mxu0 0
      %635 = vmatprep.subr.bf16.mxu0 0
      %636 = vmatpush1.bf16.msra.mxu0 0
      %637 = vmatprep.subr.bf16.mxu0 0
      %638 = vmatpush1.bf16.msra.mxu0 0
      %639 = vmatprep.subr.bf16.mxu0 0
      %640 = vmatpush1.bf16.msra.mxu0 0
      %641 = vmatprep.mubr.bf16.mxu0 0
      %642 = vmatmul.mubr.bf16.gmra.mrb[0].mxu0 %v603
      %v643 = vpop.f32.mrb[0].mxu0
      %v644 = vadd.f32 0.0, %v643
      %v645 = vpop.f32.mrb[0].mxu0
      %v646 = vadd.f32 0.0, %v645
      %v647 = vpop.f32.mrb[0].mxu0
      %v648 = vpop.f32.mrb[0].mxu0
      %649 = vdwg.mxu0
      %650 = vst [vmem:[%s226] sm:$0xff] %v644
      %651 = vst [vmem:[%s226 + $0x8] sm:$0xff] %v646
      %s652 = smul.u32 2, %s16
      %p653 = scmp.lt.s32.totalorder %s652, 3
      %s654 = scalar_select %p653, %s652, 3
      %s655 = smul.addr %s654, 8
      %s656 = scalar_lea.vmem %s5, %s655
      // Predicated region
      $region41: #{plain_layer.1} parent=39 // pred_check
        %p657 = pneg %p144
      $region42: #{plain_layer.1} parent=39 // pred_check_branch
        %659 = sbr.rel (%p657) target = $region44
      $region43: #{plain_layer.1} parent=39 // pred_region
        %s660 = smul.u32 2, %s16
      $region44: #{plain_layer.1} parent=39 // pred_fallthru
        _
    $region40: #{plain_layer.1} parent=5 // pred_fallthru
      _
    %p661 = scmp.le.s32.totalorder 2, %s11
    // Predicated region
    $region45: #{plain_layer.1} parent=5 // pred_check
      %p662 = pneg %p661
    $region46: #{plain_layer.1} parent=5 // pred_check_branch
      %664 = sbr.rel (%p662) target = $region48
    $region47: #{plain_layer.1} parent=5 // pred_region
      %s665 = ssub.s32 %s11, 2
      // Predicated region
      $region49: #{plain_layer.1} parent=47 // pred_check
        %p666 = pneg %p150
      $region50: #{plain_layer.1} parent=47 // pred_check_branch
        %668 = sbr.rel (%p666) target = $region52
      $region51: #{plain_layer.1} parent=47 // pred_region
        %s669 = smul.u32 2, %s17
        %p670 = scmp.lt.s32.totalorder %s669, 3
        %s671 = scalar_select %p670, %s669, 3
        %s672 = smul.addr %s671, 8
        %s673 = scalar_lea.vmem %s5, %s672
      $region52: #{plain_layer.1} parent=47 // pred_fallthru
        _
    $region48: #{plain_layer.1} parent=5 // pred_fallthru
      _
  $region6: #{plain_layer.1} parent=0 // loop_footer
    %s15 = sadd.s32 1, %s11
  $region7: #{plain_layer.1} parent=0 // loop_footer_branch
    %10 = sbr.rel target = $region3
  $region8: #{plain_layer.1} parent=0 // loop_exit
    _

</llo_original>
